<compile_context>
chip_gen: v7x
topology: tpu7x:2x2x1
jax: 0.10.0
libtpu: 0.0.40
codegen_flags: <defaults>
</compile_context>

<pallas_src>
import jax
import jax.numpy as jnp
from jax.experimental import pallas as pl
from jax.experimental.pallas import tpu as pltpu


# ------------------------------------------------------------------
# Kernel 1: fully fused (whole arrays resident in VMEM).
# ------------------------------------------------------------------
def _gcn_fused_kernel(adj_ref, dis_ref, x_ref, w1_ref, b1_ref, w2_ref, b2_ref,
                      o_ref):
    # adj_ref: [Np, Np] bf16 (A + remaining self-loops), zero-padded
    # dis_ref: [Np, 1]  f32  deg^-1/2 (0 on padded / zero-degree rows)
    # x_ref:   [Np, Fp] f32
    # w1_ref:  [Fp, Lp] bf16,  b1_ref: [1, Lp] f32
    # w2_ref:  [Lp, Fp] bf16,  b2_ref: [1, Fp] f32
    adj = adj_ref[...]
    dis = dis_ref[...]

    # layer 1:  h = relu( A_hat @ (X @ W1) + b1 ),  A_hat @ M = dis*(A @ (dis*M))
    xw = jnp.dot(x_ref[...].astype(jnp.bfloat16), w1_ref[...],
                 preferred_element_type=jnp.float32)                 # [Np, Lp]
    h = dis * jnp.dot(adj, (dis * xw).astype(jnp.bfloat16),
                      preferred_element_type=jnp.float32)
    h = jnp.maximum(h + b1_ref[...], 0.0)                            # f32 epilogue

    # layer 2 (reassociated):  out = (A_hat @ H) @ W2 + b2
    ah = dis * jnp.dot(adj, (dis * h).astype(jnp.bfloat16),
                       preferred_element_type=jnp.float32)
    o_ref[...] = (jnp.dot(ah.astype(jnp.bfloat16), w2_ref[...],
                          preferred_element_type=jnp.float32)
                  + b2_ref[...]).astype(o_ref.dtype)                 # lane-dense store


# ------------------------------------------------------------------
# Kernels 2/3: tiled per-layer aggregation (row-parallel, K-arbitrary).
# ------------------------------------------------------------------
def _gcn_layer1_tiled_kernel(dis_ref, adj_ref, xw_ref, b1_ref, o_ref, acc_ref):
    # Computes (per row block i):  dis_i * relu(dis_i * sum_k A[i,k] @ XW[k] + b1)
    # (the leading dis_i is the NEXT layer's pre-aggregation scaling, folded in).
    k = pl.program_id(1)

    @pl.when(k == 0)
    def _():
        acc_ref[...] = jnp.zeros_like(acc_ref)

    acc_ref[...] += jnp.dot(adj_ref[...], xw_ref[...],
                            preferred_element_type=jnp.float32)

    @pl.when(k == pl.num_programs(1) - 1)
    def _():
        dis = dis_ref[...]
        h = jnp.maximum(dis * acc_ref[...] + b1_ref[...], 0.0)
        o_ref[...] = (dis * h).astype(o_ref.dtype)


def _gcn_layer2_tiled_kernel(dis_ref, adj_ref, hb_ref, w2_ref, b2_ref, o_ref,
                             acc_ref):
    # Computes (per row block i):  (dis_i * sum_k A[i,k] @ HB[k]) @ W2 + b2
    k = pl.program_id(1)

    @pl.when(k == 0)
    def _():
        acc_ref[...] = jnp.zeros_like(acc_ref)

    acc_ref[...] += jnp.dot(adj_ref[...], hb_ref[...],
                            preferred_element_type=jnp.float32)

    @pl.when(k == pl.num_programs(1) - 1)
    def _():
        ah = (dis_ref[...] * acc_ref[...]).astype(jnp.bfloat16)
        o_ref[...] = (jnp.dot(ah, w2_ref[...],
                              preferred_element_type=jnp.float32)
                      + b2_ref[...]).astype(o_ref.dtype)


# ------------------------------------------------------------------
# Plain-JAX glue
# ------------------------------------------------------------------
def _round_up(x, m):
    return (x + m - 1) // m * m


def _pick_tile(n):
    for t in (512, 256, 128):
        if n % t == 0:
            return t
    return 128


def _vmem_limit(footprint_bytes):
    # Explicit scoped-VMEM limit: footprint + headroom, clamped to [32, 64] MiB
    # (64 MiB == v7x physical VMEM; v5e/v6e have 128 MiB so the clamp is safe).
    return int(min(64 << 20, max(32 << 20, 2 * footprint_bytes + (4 << 20))))


def build_adjacency_and_dis(edge_index, edge_weight, num_nodes, padded_n):
    """bf16 (A + remaining self-loops) zero-padded to [Np, Np], plus f32 deg^-1/2.

    Matches PyG gcn_norm's add_remaining_self_loops: nodes with an explicit
    self-loop keep their weight (summed if duplicated), others get 1.0.
    Duplicate off-diagonal edges accumulate (uncoalesced PyG behavior).
    """
    src = edge_index[0]
    dst = edge_index[1]
    w = edge_weight.astype(jnp.float32)
    self_mask = src == dst

    adj = jnp.zeros((padded_n, padded_n), jnp.float32)
    adj = adj.at[dst, src].add(jnp.where(self_mask, 0.0, w))

    loop_w = jnp.zeros((padded_n,), jnp.float32).at[src].add(
        jnp.where(self_mask, w, 0.0))
    has_loop = jnp.zeros((padded_n,), jnp.float32).at[src].add(
        self_mask.astype(jnp.float32)) > 0.0
    node_mask = jnp.arange(padded_n) < num_nodes
    diag = jnp.where(node_mask, jnp.where(has_loop, loop_w, 1.0), 0.0)
    idx = jnp.arange(padded_n)
    adj = adj.at[idx, idx].add(diag)              # in-place diagonal scatter

    deg = jnp.sum(adj, axis=1, keepdims=True)     # f32 deg, fused with the build
    dis = jnp.where(deg > 0.0,
                    jax.lax.rsqrt(jnp.where(deg > 0.0, deg, 1.0)),
                    0.0)
    return adj.astype(jnp.bfloat16), dis


def gcn_model_forward(params, x, edge_index, edge_weight, *, force_tiled=False):
    n, feat_dim = x.shape
    latent_dim = params["w1_t"].shape[1]

    np_ = _round_up(n, 128)          # lane-dense + full MXU tiles
    fp = _round_up(feat_dim, 128)
    lp = _round_up(latent_dim, 128)

    # TODO(synk): edge-list -> dense scatter-add stays in XLA; a true sparse
    # SpMM would use scalar-prefetched edge offsets inside the kernel.
    adj_bf16, dis = build_adjacency_and_dis(edge_index, edge_weight, n, np_)

    x_p = jnp.zeros((np_, fp), jnp.float32).at[:n, :feat_dim].set(
        x.astype(jnp.float32))
    w1_p = jnp.zeros((fp, lp), jnp.bfloat16).at[:feat_dim, :latent_dim].set(
        params["w1_t"].astype(jnp.bfloat16))
    b1_p = jnp.zeros((1, lp), jnp.float32).at[:, :latent_dim].set(params["b1"])
    w2_p = jnp.zeros((lp, fp), jnp.bfloat16).at[:latent_dim, :feat_dim].set(
        params["w2_t"].astype(jnp.bfloat16))
    b2_p = jnp.zeros((1, fp), jnp.float32).at[:, :feat_dim].set(params["b2"])

    adj_bytes = 2 * np_ * np_
    io_bytes = (adj_bytes + 4 * np_ + 4 * np_ * fp
                + 2 * fp * lp + 4 * lp + 2 * lp * fp + 4 * fp + 4 * np_ * fp)
    fused_footprint = io_bytes + 4 * np_ * lp * 2 + 4 * np_ * fp  # live f32 temps
    use_tiled = force_tiled or fused_footprint > (24 << 20)

    agg_flops = 4 * np_ * np_ * lp                 # two N^2 aggregations
    xform_flops = 4 * np_ * fp * lp                # two feature transforms

    if not use_tiled:
        # ---------- fully fused, whole-VMEM path (small / medium graphs) ----
        vmem = pl.BlockSpec(memory_space=pltpu.MemorySpace.VMEM)
        out_p = pl.pallas_call(
            _gcn_fused_kernel,
            out_shape=jax.ShapeDtypeStruct((np_, fp), jnp.float32),
            in_specs=[vmem] * 7,
            out_specs=vmem,
            compiler_params=pltpu.CompilerParams(
                vmem_limit_bytes=_vmem_limit(fused_footprint)),
            cost_estimate=pl.CostEstimate(
                flops=agg_flops + xform_flops,
                transcendentals=0,
                bytes_accessed=io_bytes),
        )(adj_bf16, dis, x_p, w1_p, b1_p, w2_p, b2_p)
        return out_p[:n, :feat_dim]

    # ---------- tiled path: bounded VMEM, pipelined, megacore-parallel ------
    tm = _pick_tile(np_)
    tk = _pick_tile(np_)
    grid = (np_ // tm, np_ // tk)
    dimsem = ("parallel", "arbitrary")

    # Small node-parallel feature transform for layer 1 stays in XLA.
    # TODO(synk): fold X @ W1 into a tiny extra pallas_call if it shows up.
    xw_b = (dis * jnp.dot(x_p.astype(jnp.bfloat16), w1_p,
                          preferred_element_type=jnp.float32)).astype(jnp.bfloat16)

    l1_bytes = 2 * (2 * tm * tk + 2 * tk * lp + 2 * tm * lp) + 4 * tm * lp \
        + 4 * tm + 4 * lp
    h_b = pl.pallas_call(
        _gcn_layer1_tiled_kernel,
        out_shape=jax.ShapeDtypeStruct((np_, lp), jnp.bfloat16),
        grid_spec=pltpu.PrefetchScalarGridSpec(
            num_scalar_prefetch=0, grid=grid,
            in_specs=[
                pl.BlockSpec((tm, 1), lambda i, k: (i, 0)),    # dis rows
                pl.BlockSpec((tm, tk), lambda i, k: (i, k)),   # bf16 adj tile
                pl.BlockSpec((tk, lp), lambda i, k: (k, 0)),   # dis*(X@W1)
                pl.BlockSpec((1, lp), lambda i, k: (0, 0)),    # b1
            ],
            out_specs=pl.BlockSpec((tm, lp), lambda i, k: (i, 0)),
            scratch_shapes=[pltpu.VMEM((tm, lp), jnp.float32)]),
        compiler_params=pltpu.CompilerParams(
            dimension_semantics=dimsem,
            vmem_limit_bytes=_vmem_limit(l1_bytes)),
        cost_estimate=pl.CostEstimate(
            flops=2 * np_ * np_ * lp, transcendentals=0,
            bytes_accessed=adj_bytes + 2 * np_ * lp * 2 + 4 * np_ + 4 * lp),
    )(dis, adj_bf16, xw_b, b1_p)

    l2_bytes = 2 * (2 * tm * tk + 2 * tk * lp + 4 * tm * fp) + 4 * tm * lp \
        + 2 * lp * fp + 4 * fp + 4 * tm
    out_p = pl.pallas_call(
        _gcn_layer2_tiled_kernel,
        out_shape=jax.ShapeDtypeStruct((np_, fp), jnp.float32),
        grid_spec=pltpu.PrefetchScalarGridSpec(
            num_scalar_prefetch=0, grid=grid,
            in_specs=[
                pl.BlockSpec((tm, 1), lambda i, k: (i, 0)),    # dis rows
                pl.BlockSpec((tm, tk), lambda i, k: (i, k)),   # bf16 adj tile
                pl.BlockSpec((tk, lp), lambda i, k: (k, 0)),   # dis*H (bf16)
                pl.BlockSpec((lp, fp), lambda i, k: (0, 0)),   # W2
                pl.BlockSpec((1, fp), lambda i, k: (0, 0)),    # b2
            ],
            out_specs=pl.BlockSpec((tm, fp), lambda i, k: (i, 0)),
            scratch_shapes=[pltpu.VMEM((tm, lp), jnp.float32)]),
        compiler_params=pltpu.CompilerParams(
            dimension_semantics=dimsem,
            vmem_limit_bytes=_vmem_limit(l2_bytes)),
        cost_estimate=pl.CostEstimate(
            flops=2 * np_ * np_ * lp + 2 * np_ * lp * fp, transcendentals=0,
            bytes_accessed=adj_bytes + 2 * np_ * lp + 4 * np_ * fp
            + 2 * lp * fp + 4 * fp + 4 * np_),
    )(dis, adj_bf16, h_b, w2_p, b2_p)
    return out_p[:n, :feat_dim]


def gcn_reference(params, x, edge_index, edge_weight):
    """Pure-JAX f32 reference (PyG GCNConv semantics) for tolerance checks."""
    n = x.shape[0]
    src, dst = edge_index[0], edge_index[1]
    w = edge_weight.astype(jnp.float32)
    self_mask = src == dst
    adj = jnp.zeros((n, n), jnp.float32).at[dst, src].add(
        jnp.where(self_mask, 0.0, w))
    loop_w = jnp.zeros((n,), jnp.float32).at[src].add(
        jnp.where(self_mask, w, 0.0))
    has_loop = jnp.zeros((n,), jnp.float32).at[src].add(
        self_mask.astype(jnp.float32)) > 0.0
    idx = jnp.arange(n)
    adj = adj.at[idx, idx].add(jnp.where(has_loop, loop_w, 1.0))
    deg = adj.sum(axis=1, keepdims=True)
    dis = jnp.where(deg > 0.0, 1.0 / jnp.sqrt(jnp.where(deg > 0.0, deg, 1.0)), 0.0)
    a_hat = dis * adj * dis.T
    h = jnp.maximum(a_hat @ (x @ params["w1_t"]) + params["b1"], 0.0)
    return a_hat @ h @ params["w2_t"] + params["b2"]


def init_params(key, feat_dim, latent_dim):
    """Deterministic glorot-style init (PyG uses glorot weights, zero bias)."""
    k1, k2 = jax.random.split(key)

    def glorot(k, fan_in, fan_out):
        limit = jnp.sqrt(6.0 / (fan_in + fan_out))
        return jax.random.uniform(k, (fan_in, fan_out), jnp.float32,
                                  -limit, limit)

    return {
        "w1_t": glorot(k1, feat_dim, latent_dim),
        "b1": jnp.zeros((1, latent_dim), jnp.float32),
        "w2_t": glorot(k2, latent_dim, feat_dim),
        "b2": jnp.zeros((1, feat_dim), jnp.float32),
    }


if __name__ == "__main__":
    # model_config: hidden_size3 (feat_dim) = 32, latent_dim = 16
    feat_dim = 32
    latent_dim = 16
    num_nodes = 16
    num_edges = 40

    key = jax.random.PRNGKey(0)
    k_x, k_src, k_dst, k_w, k_p = jax.random.split(key, 5)

    x = jax.random.normal(k_x, (num_nodes, feat_dim), jnp.float32)
    src = jax.random.randint(k_src, (num_edges,), 0, num_nodes, jnp.int32)
    dst = jax.random.randint(k_dst, (num_edges,), 0, num_nodes, jnp.int32)
    edge_index = jnp.stack([src, dst], axis=0)               # [2, E]
    edge_weight = jax.random.uniform(k_w, (num_edges,), jnp.float32, 0.1, 1.0)

    params = init_params(k_p, feat_dim, latent_dim)

    fwd = jax.jit(gcn_model_forward, static_argnames=("force_tiled",))

    # fused whole-VMEM path (default for these sizes)
    out = fwd(params, x, edge_index, edge_weight)
    jax.block_until_ready(out)
    assert out.shape == (num_nodes, feat_dim), out.shape
    assert bool(jnp.all(jnp.isfinite(out)))

    ref = gcn_reference(params, x, edge_index, edge_weight)
    assert float(jnp.max(jnp.abs(out - ref))) < 5e-2, "fused path mismatch"

    # exercise the tiled / pipelined path as well (grid is (1,1) at this size)
    out_t = fwd(params, x, edge_index, edge_weight, force_tiled=True)
    jax.block_until_ready(out_t)
    assert float(jnp.max(jnp.abs(out_t - ref))) < 5e-2, "tiled path mismatch"

    print("KERNEL_OK")
</pallas_src>

<mosaic_0001>
module attributes {stable_mosaic.version = 11 : i64} {
  func.func private @main(%arg0: i32) attributes {dimension_semantics = [#tpu.dimension_semantics<core_parallel>], iteration_bounds = array<i64: 2>, tpu.core_type = #tpu.core_type<sc_scalar_subcore>, window_params = []} {
    return
  }
}

module attributes {stable_mosaic.version = 11 : i64} {
  func.func private @main(%arg0: i32) attributes {dimension_semantics = [#tpu.dimension_semantics<core_parallel>], iteration_bounds = array<i64: 2>, tpu.core_type = #tpu.core_type<sc_scalar_subcore>, window_params = []} {
    return
  }
}

module attributes {stable_mosaic.version = 11 : i64} {
  func.func @_gcn_fused_kernel(%arg0: memref<128x128xbf16, #tpu.memory_space<vmem>>, %arg1: memref<128x1xf32, #tpu.memory_space<vmem>>, %arg2: memref<128x128xf32, #tpu.memory_space<vmem>>, %arg3: memref<128x128xbf16, #tpu.memory_space<vmem>>, %arg4: memref<1x128xf32, #tpu.memory_space<vmem>>, %arg5: memref<128x128xbf16, #tpu.memory_space<vmem>>, %arg6: memref<1x128xf32, #tpu.memory_space<vmem>>, %arg7: memref<128x128xf32, #tpu.memory_space<vmem>>) attributes {dimension_semantics = [], scalar_prefetch = 0 : i64, scratch_operands = 0 : i64, tpu.core_type = #tpu.core_type<tc>} {
    %c0 = arith.constant 0 : index
    %c0_0 = arith.constant 0 : index
    %0 = vector.load %arg0[%c0, %c0_0] : memref<128x128xbf16, #tpu.memory_space<vmem>>, vector<128x128xbf16>
    %c0_1 = arith.constant 0 : index
    %c0_2 = arith.constant 0 : index
    %1 = vector.load %arg1[%c0_1, %c0_2] : memref<128x1xf32, #tpu.memory_space<vmem>>, vector<128x1xf32>
    %c0_3 = arith.constant 0 : index
    %c0_4 = arith.constant 0 : index
    %2 = vector.load %arg2[%c0_3, %c0_4] : memref<128x128xf32, #tpu.memory_space<vmem>>, vector<128x128xf32>
    %3 = arith.truncf %2 : vector<128x128xf32> to vector<128x128xbf16>
    %c0_5 = arith.constant 0 : index
    %c0_6 = arith.constant 0 : index
    %4 = vector.load %arg3[%c0_5, %c0_6] : memref<128x128xbf16, #tpu.memory_space<vmem>>, vector<128x128xbf16>
    %cst = arith.constant dense<0.000000e+00> : vector<128x128xf32>
    %5 = tpu.matmul %3, %4, %cst {dimension_numbers = #tpu.dot_dimension_numbers<[1], [0], [0], [1], [0, 0, 1, 1], [], []>} : vector<128x128xbf16>, vector<128x128xbf16>, vector<128x128xf32> -> vector<128x128xf32>
    %6 = vector.broadcast %1 : vector<128x1xf32> to vector<128x128xf32>
    %7 = arith.mulf %6, %5 : vector<128x128xf32>
    %8 = arith.truncf %7 : vector<128x128xf32> to vector<128x128xbf16>
    %cst_7 = arith.constant dense<0.000000e+00> : vector<128x128xf32>
    %9 = tpu.matmul %0, %8, %cst_7 {dimension_numbers = #tpu.dot_dimension_numbers<[1], [0], [0], [1], [0, 0, 1, 1], [], []>} : vector<128x128xbf16>, vector<128x128xbf16>, vector<128x128xf32> -> vector<128x128xf32>
    %10 = vector.broadcast %1 : vector<128x1xf32> to vector<128x128xf32>
    %11 = arith.mulf %10, %9 : vector<128x128xf32>
    %c0_8 = arith.constant 0 : index
    %c0_9 = arith.constant 0 : index
    %12 = vector.load %arg4[%c0_8, %c0_9] : memref<1x128xf32, #tpu.memory_space<vmem>>, vector<1x128xf32>
    %13 = vector.broadcast %12 : vector<1x128xf32> to vector<128x128xf32>
    %14 = arith.addf %11, %13 : vector<128x128xf32>
    %cst_10 = arith.constant 0.000000e+00 : f32
    %15 = vector.broadcast %cst_10 : f32 to vector<128x128xf32>
    %16 = arith.maximumf %14, %15 : vector<128x128xf32>
    %17 = vector.broadcast %1 : vector<128x1xf32> to vector<128x128xf32>
    %18 = arith.mulf %17, %16 : vector<128x128xf32>
    %19 = arith.truncf %18 : vector<128x128xf32> to vector<128x128xbf16>
    %cst_11 = arith.constant dense<0.000000e+00> : vector<128x128xf32>
    %20 = tpu.matmul %0, %19, %cst_11 {dimension_numbers = #tpu.dot_dimension_numbers<[1], [0], [0], [1], [0, 0, 1, 1], [], []>} : vector<128x128xbf16>, vector<128x128xbf16>, vector<128x128xf32> -> vector<128x128xf32>
    %21 = vector.broadcast %1 : vector<128x1xf32> to vector<128x128xf32>
    %22 = arith.mulf %21, %20 : vector<128x128xf32>
    %23 = arith.truncf %22 : vector<128x128xf32> to vector<128x128xbf16>
    %c0_12 = arith.constant 0 : index
    %c0_13 = arith.constant 0 : index
    %24 = vector.load %arg5[%c0_12, %c0_13] : memref<128x128xbf16, #tpu.memory_space<vmem>>, vector<128x128xbf16>
    %cst_14 = arith.constant dense<0.000000e+00> : vector<128x128xf32>
    %25 = tpu.matmul %23, %24, %cst_14 {dimension_numbers = #tpu.dot_dimension_numbers<[1], [0], [0], [1], [0, 0, 1, 1], [], []>} : vector<128x128xbf16>, vector<128x128xbf16>, vector<128x128xf32> -> vector<128x128xf32>
    %c0_15 = arith.constant 0 : index
    %c0_16 = arith.constant 0 : index
    %26 = vector.load %arg6[%c0_15, %c0_16] : memref<1x128xf32, #tpu.memory_space<vmem>>, vector<1x128xf32>
    %27 = vector.broadcast %26 : vector<1x128xf32> to vector<128x128xf32>
    %28 = arith.addf %25, %27 : vector<128x128xf32>
    %c0_17 = arith.constant 0 : index
    %c0_18 = arith.constant 0 : index
    %29 = vector.load %arg7[%c0_17, %c0_18] : memref<128x128xf32, #tpu.memory_space<vmem>>, vector<128x128xf32>
    tpu.vector_store %arg7[%c0_17, %c0_18], %28 {strides = array<i32>} : memref<128x128xf32, #tpu.memory_space<vmem>>, vector<128x128xf32>,
    return
  }
}

</mosaic_0001>

<llo_original>
// kernel: gcn_model_forward.1
$region0: #{gcn_model_forward.1}
  #allocation0 [shape = 'u32[]', space=smem, size = 0x4, offset = 0x4, fixed_abs, tag = 'smem constant byte address 0x4 - core index']
  #allocation1 [shape = 'u32[144,128]{1,0:T(1,128)}', space=vmem, size = 0x12000, scoped, tag = 'internal scratch']
  %s0 = inlined_call_operand.vmem [shape: bf16[128,128], index: 0, kind: input, shape index: {}]
  %s1 = inlined_call_operand.vmem [shape: f32[128,1], index: 1, kind: input, shape index: {}]
  %s2 = inlined_call_operand.vmem [shape: f32[128,128], index: 2, kind: input, shape index: {}]
  %s3 = inlined_call_operand.vmem [shape: bf16[128,128], index: 3, kind: input, shape index: {}]
  %s4 = inlined_call_operand.vmem [shape: f32[1,128], index: 4, kind: input, shape index: {}]
  %s5 = inlined_call_operand.vmem [shape: bf16[128,128], index: 5, kind: input, shape index: {}]
  %s6 = inlined_call_operand.vmem [shape: f32[1,128], index: 6, kind: input, shape index: {}]
  %s7 = inlined_call_operand.vmem [shape: f32[128,128], index: 7, kind: output, shape index: {}]
  %s8 = sld [smem:[#allocation0]]
  $region38: #{gcn_model_forward.1} parent=0
    _
  %s10 = ssub.s32 1, %s8
  %s11 = scalar_select 0, %s10, %s8
  // Predicated region
  $region2: #{gcn_model_forward.1} parent=0 // pred_check
    _
  $region3: #{gcn_model_forward.1} parent=0 // pred_check_branch
    %13 = sbr.rel (0) target = $region5
  $region4: #{gcn_model_forward.1} parent=0 // pred_region
    _
  $region5: #{gcn_model_forward.1} parent=0 // pred_fallthru
    _
  // Predicated region
  $region6: #{gcn_model_forward.1} parent=0 // pred_check
    _
  $region7: #{gcn_model_forward.1} parent=0 // pred_check_branch
    %15 = sbr.rel (0) target = $region9
  $region8: #{gcn_model_forward.1} parent=0 // pred_region
    _
  $region9: #{gcn_model_forward.1} parent=0 // pred_fallthru
    _
  // Predicated region
  $region10: #{gcn_model_forward.1} parent=0 // pred_check
    _
  $region11: #{gcn_model_forward.1} parent=0 // pred_check_branch
    %17 = sbr.rel (0) target = $region13
  $region12: #{gcn_model_forward.1} parent=0 // pred_region
    _
  $region13: #{gcn_model_forward.1} parent=0 // pred_fallthru
    _
  // Predicated region
  $region14: #{gcn_model_forward.1} parent=0 // pred_check
    _
  $region15: #{gcn_model_forward.1} parent=0 // pred_check_branch
    %19 = sbr.rel (0) target = $region17
  $region16: #{gcn_model_forward.1} parent=0 // pred_region
    _
  $region17: #{gcn_model_forward.1} parent=0 // pred_fallthru
    _
  // Predicated region
  $region18: #{gcn_model_forward.1} parent=0 // pred_check
    _
  $region19: #{gcn_model_forward.1} parent=0 // pred_check_branch
    %21 = sbr.rel (0) target = $region21
  $region20: #{gcn_model_forward.1} parent=0 // pred_region
    _
  $region21: #{gcn_model_forward.1} parent=0 // pred_fallthru
    _
  // Predicated region
  $region22: #{gcn_model_forward.1} parent=0 // pred_check
    _
  $region23: #{gcn_model_forward.1} parent=0 // pred_check_branch
    %23 = sbr.rel (0) target = $region25
  $region24: #{gcn_model_forward.1} parent=0 // pred_region
    _
  $region25: #{gcn_model_forward.1} parent=0 // pred_fallthru
    _
  // Predicated region
  $region26: #{gcn_model_forward.1} parent=0 // pred_check
    _
  $region27: #{gcn_model_forward.1} parent=0 // pred_check_branch
    %25 = sbr.rel (0) target = $region29
  $region28: #{gcn_model_forward.1} parent=0 // pred_region
    _
  $region29: #{gcn_model_forward.1} parent=0 // pred_fallthru
    _
  %v27 = vld [vmem:[%s0] sm:$0xf]
  %v28 = vld [vmem:[%s0 + $0x4] sm:$0xf]
  %v29 = vld [vmem:[%s0 + $0x8] sm:$0xf]
  %v30 = vld [vmem:[%s0 + $0xc] sm:$0xf]
  %v31 = vld [vmem:[%s0 + $0x10] sm:$0xf]
  %v32 = vld [vmem:[%s0 + $0x14] sm:$0xf]
  %v33 = vld [vmem:[%s0 + $0x18] sm:$0xf]
  %v34 = vld [vmem:[%s0 + $0x1c] sm:$0xf]
  %v35 = vld [vmem:[%s0 + $0x20] sm:$0xf]
  %v36 = vld [vmem:[%s0 + $0x24] sm:$0xf]
  %v37 = vld [vmem:[%s0 + $0x28] sm:$0xf]
  %v38 = vld [vmem:[%s0 + $0x2c] sm:$0xf]
  %v39 = vld [vmem:[%s0 + $0x30] sm:$0xf]
  %v40 = vld [vmem:[%s0 + $0x34] sm:$0xf]
  %v41 = vld [vmem:[%s0 + $0x38] sm:$0xf]
  %v42 = vld [vmem:[%s0 + $0x3c] sm:$0xf]
  %v43 = vld [vmem:[%s1] sm:$0xff]
  %v44 = vld [vmem:[%s1 + $0x8] sm:$0xff]
  %v45 = vld [vmem:[%s1 + $0x10] sm:$0xff]
  %v46 = vld [vmem:[%s1 + $0x18] sm:$0xff]
  %v47 = vld [vmem:[%s1 + $0x20] sm:$0xff]
  %v48 = vld [vmem:[%s1 + $0x28] sm:$0xff]
  %v49 = vld [vmem:[%s1 + $0x30] sm:$0xff]
  %v50 = vld [vmem:[%s1 + $0x38] sm:$0xff]
  %v51 = vld [vmem:[%s1 + $0x40] sm:$0xff]
  %v52 = vld [vmem:[%s1 + $0x48] sm:$0xff]
  %v53 = vld [vmem:[%s1 + $0x50] sm:$0xff]
  %v54 = vld [vmem:[%s1 + $0x58] sm:$0xff]
  %v55 = vld [vmem:[%s1 + $0x60] sm:$0xff]
  %v56 = vld [vmem:[%s1 + $0x68] sm:$0xff]
  %v57 = vld [vmem:[%s1 + $0x70] sm:$0xff]
  %v58 = vld [vmem:[%s1 + $0x78] sm:$0xff]
  %v59 = vld [vmem:[%s2] sm:$0xff]
  %v60 = vld [vmem:[%s2 + $0x8] sm:$0xff]
  %v61 = vld [vmem:[%s2 + $0x10] sm:$0xff]
  %v62 = vld [vmem:[%s2 + $0x18] sm:$0xff]
  %v63 = vld [vmem:[%s2 + $0x20] sm:$0xff]
  %v64 = vld [vmem:[%s2 + $0x28] sm:$0xff]
  %v65 = vld [vmem:[%s2 + $0x30] sm:$0xff]
  %v66 = vld [vmem:[%s2 + $0x38] sm:$0xff]
  %v67 = vld [vmem:[%s2 + $0x40] sm:$0xff]
  %v68 = vld [vmem:[%s2 + $0x48] sm:$0xff]
  %v69 = vld [vmem:[%s2 + $0x50] sm:$0xff]
  %v70 = vld [vmem:[%s2 + $0x58] sm:$0xff]
  %v71 = vld [vmem:[%s2 + $0x60] sm:$0xff]
  %v72 = vld [vmem:[%s2 + $0x68] sm:$0xff]
  %v73 = vld [vmem:[%s2 + $0x70] sm:$0xff]
  %v74 = vld [vmem:[%s2 + $0x78] sm:$0xff]
  %v75 = vpack.c.bf16 %v60, %v59
  %v76 = vpack.c.bf16 %v62, %v61
  %v77 = vpack.c.bf16 %v64, %v63
  %v78 = vpack.c.bf16 %v66, %v65
  %v79 = vpack.c.bf16 %v68, %v67
  %v80 = vpack.c.bf16 %v70, %v69
  %v81 = vpack.c.bf16 %v72, %v71
  %v82 = vpack.c.bf16 %v74, %v73
  %v83 = vld [vmem:[%s3] sm:$0xf]
  %v84 = vld [vmem:[%s3 + $0x4] sm:$0xf]
  %v85 = vld [vmem:[%s3 + $0x8] sm:$0xf]
  %v86 = vld [vmem:[%s3 + $0xc] sm:$0xf]
  %v87 = vld [vmem:[%s3 + $0x10] sm:$0xf]
  %v88 = vld [vmem:[%s3 + $0x14] sm:$0xf]
  %v89 = vld [vmem:[%s3 + $0x18] sm:$0xf]
  %v90 = vld [vmem:[%s3 + $0x1c] sm:$0xf]
  %v91 = vld [vmem:[%s3 + $0x20] sm:$0xf]
  %v92 = vld [vmem:[%s3 + $0x24] sm:$0xf]
  %v93 = vld [vmem:[%s3 + $0x28] sm:$0xf]
  %v94 = vld [vmem:[%s3 + $0x2c] sm:$0xf]
  %v95 = vld [vmem:[%s3 + $0x30] sm:$0xf]
  %v96 = vld [vmem:[%s3 + $0x34] sm:$0xf]
  %v97 = vld [vmem:[%s3 + $0x38] sm:$0xf]
  %v98 = vld [vmem:[%s3 + $0x3c] sm:$0xf]
  %v115 = vunpack.c.l.b16 %v83
  %v116 = vunpack.c.l.b16 %v84
  %v117 = vunpack.c.l.b16 %v85
  %v118 = vunpack.c.l.b16 %v86
  %v119 = vunpack.c.l.b16 %v87
  %v120 = vunpack.c.l.b16 %v88
  %v121 = vunpack.c.l.b16 %v89
  %v122 = vunpack.c.l.b16 %v90
  %v123 = vunpack.c.l.b16 %v91
  %v124 = vunpack.c.l.b16 %v92
  %v125 = vunpack.c.l.b16 %v93
  %v126 = vunpack.c.l.b16 %v94
  %v127 = vunpack.c.l.b16 %v95
  %v128 = vunpack.c.l.b16 %v96
  %v129 = vunpack.c.l.b16 %v97
  %v130 = vunpack.c.l.b16 %v98
  %v131 = vpack.c.b16 %v116, %v115
  %v132 = vpack.c.b16 %v118, %v117
  %v133 = vpack.c.b16 %v120, %v119
  %v134 = vpack.c.b16 %v122, %v121
  %v135 = vpack.c.b16 %v124, %v123
  %v136 = vpack.c.b16 %v126, %v125
  %v137 = vpack.c.b16 %v128, %v127
  %v138 = vpack.c.b16 %v130, %v129
  %147 = vmatprep.subr.bf16.mxu0 0
  %148 = vmatpush1.bf16.msra.mxu0 %v131
  %149 = vmatprep.subr.bf16.mxu0 0
  %150 = vmatpush1.bf16.msra.mxu0 %v132
  %151 = vmatprep.subr.bf16.mxu0 0
  %152 = vmatpush1.bf16.msra.mxu0 %v133
  %153 = vmatprep.subr.bf16.mxu0 0
  %154 = vmatpush1.bf16.msra.mxu0 %v134
  %155 = vmatprep.subr.bf16.mxu0 0
  %156 = vmatpush1.bf16.msra.mxu0 %v135
  %157 = vmatprep.subr.bf16.mxu0 0
  %158 = vmatpush1.bf16.msra.mxu0 %v136
  %159 = vmatprep.subr.bf16.mxu0 0
  %160 = vmatpush1.bf16.msra.mxu0 %v137
  %161 = vmatprep.subr.bf16.mxu0 0
  %162 = vmatpush1.bf16.msra.mxu0 %v138
  %163 = vmatprep.subr.bf16.mxu0 0
  %164 = vmatpush1.bf16.msra.mxu0 0
  %165 = vmatprep.subr.bf16.mxu0 0
  %166 = vmatpush1.bf16.msra.mxu0 0
  %167 = vmatprep.subr.bf16.mxu0 0
  %168 = vmatpush1.bf16.msra.mxu0 0
  %169 = vmatprep.subr.bf16.mxu0 0
  %170 = vmatpush1.bf16.msra.mxu0 0
  %171 = vmatprep.subr.bf16.mxu0 0
  %172 = vmatpush1.bf16.msra.mxu0 0
  %173 = vmatprep.subr.bf16.mxu0 0
  %174 = vmatpush1.bf16.msra.mxu0 0
  %175 = vmatprep.subr.bf16.mxu0 0
  %176 = vmatpush1.bf16.msra.mxu0 0
  %177 = vmatprep.subr.bf16.mxu0 0
  %178 = vmatpush1.bf16.msra.mxu0 0
  %179 = vmatprep.mubr.bf16.mxu0 0
  %180 = vmatmul.mubr.bf16.gmra.mrb[0].mxu0 %v75
  %v181 = vpop.f32.mrb[0].mxu0
  %v182 = vadd.f32 0.0, %v181
  %v183 = vpop.f32.mrb[0].mxu0
  %v184 = vpop.f32.mrb[0].mxu0
  %v185 = vadd.f32 0.0, %v184
  %v186 = vpop.f32.mrb[0].mxu0
  %187 = vmatprep.mubr.bf16.mxu0 0
  %188 = vmatmul.mubr.bf16.gmra.mrb[0].mxu0 %v76
  %v189 = vpop.f32.mrb[0].mxu0
  %v190 = vadd.f32 0.0, %v189
  %v191 = vpop.f32.mrb[0].mxu0
  %v192 = vpop.f32.mrb[0].mxu0
  %v193 = vadd.f32 0.0, %v192
  %v194 = vpop.f32.mrb[0].mxu0
  %195 = vmatprep.mubr.bf16.mxu0 0
  %196 = vmatmul.mubr.bf16.gmra.mrb[0].mxu0 %v77
  %v197 = vpop.f32.mrb[0].mxu0
  %v198 = vadd.f32 0.0, %v197
  %v199 = vpop.f32.mrb[0].mxu0
  %v200 = vpop.f32.mrb[0].mxu0
  %v201 = vadd.f32 0.0, %v200
  %v202 = vpop.f32.mrb[0].mxu0
  %203 = vmatprep.mubr.bf16.mxu0 0
  %204 = vmatmul.mubr.bf16.gmra.mrb[0].mxu0 %v78
  %v205 = vpop.f32.mrb[0].mxu0
  %v206 = vadd.f32 0.0, %v205
  %v207 = vpop.f32.mrb[0].mxu0
  %v208 = vpop.f32.mrb[0].mxu0
  %v209 = vadd.f32 0.0, %v208
  %v210 = vpop.f32.mrb[0].mxu0
  %211 = vmatprep.mubr.bf16.mxu0 0
  %212 = vmatmul.mubr.bf16.gmra.mrb[0].mxu0 %v79
  %v213 = vpop.f32.mrb[0].mxu0
  %v214 = vadd.f32 0.0, %v213
  %v215 = vpop.f32.mrb[0].mxu0
  %v216 = vpop.f32.mrb[0].mxu0
  %v217 = vadd.f32 0.0, %v216
  %v218 = vpop.f32.mrb[0].mxu0
  %219 = vmatprep.mubr.bf16.mxu0 0
  %220 = vmatmul.mubr.bf16.gmra.mrb[0].mxu0 %v80
  %v221 = vpop.f32.mrb[0].mxu0
  %v222 = vadd.f32 0.0, %v221
  %v223 = vpop.f32.mrb[0].mxu0
  %v224 = vpop.f32.mrb[0].mxu0
  %v225 = vadd.f32 0.0, %v224
  %v226 = vpop.f32.mrb[0].mxu0
  %227 = vmatprep.mubr.bf16.mxu0 0
  %228 = vmatmul.mubr.bf16.gmra.mrb[0].mxu0 %v81
  %v229 = vpop.f32.mrb[0].mxu0
  %v230 = vadd.f32 0.0, %v229
  %v231 = vpop.f32.mrb[0].mxu0
  %v232 = vpop.f32.mrb[0].mxu0
  %v233 = vadd.f32 0.0, %v232
  %v234 = vpop.f32.mrb[0].mxu0
  %235 = vmatprep.mubr.bf16.mxu0 0
  %236 = vmatmul.mubr.bf16.gmra.mrb[0].mxu0 %v82
  %v237 = vpop.f32.mrb[0].mxu0
  %v238 = vadd.f32 0.0, %v237
  %v239 = vpop.f32.mrb[0].mxu0
  %v240 = vpop.f32.mrb[0].mxu0
  %v241 = vadd.f32 0.0, %v240
  %v242 = vpop.f32.mrb[0].mxu0
  %243 = vdwg.mxu0
  %245 = vset.pattern.permute.xlu0 0
  %246 = vperm.xlu0 %245, %v43
  %v247 = vpop.permute.xlu0 %246
  %250 = vset.pattern.permute.xlu0 0
  %251 = vperm.xlu0 %250, %v44
  %v252 = vpop.permute.xlu0 %251
  %255 = vset.pattern.permute.xlu0 0
  %256 = vperm.xlu0 %255, %v45
  %v257 = vpop.permute.xlu0 %256
  %260 = vset.pattern.permute.xlu0 0
  %261 = vperm.xlu0 %260, %v46
  %v262 = vpop.permute.xlu0 %261
  %265 = vset.pattern.permute.xlu0 0
  %266 = vperm.xlu0 %265, %v47
  %v267 = vpop.permute.xlu0 %266
  %270 = vset.pattern.permute.xlu0 0
  %271 = vperm.xlu0 %270, %v48
  %v272 = vpop.permute.xlu0 %271
  %275 = vset.pattern.permute.xlu0 0
  %276 = vperm.xlu0 %275, %v49
  %v277 = vpop.permute.xlu0 %276
  %280 = vset.pattern.permute.xlu0 0
  %281 = vperm.xlu0 %280, %v50
  %v282 = vpop.permute.xlu0 %281
  %285 = vset.pattern.permute.xlu0 0
  %286 = vperm.xlu0 %285, %v51
  %v287 = vpop.permute.xlu0 %286
  %290 = vset.pattern.permute.xlu0 0
  %291 = vperm.xlu0 %290, %v52
  %v292 = vpop.permute.xlu0 %291
  %295 = vset.pattern.permute.xlu0 0
  %296 = vperm.xlu0 %295, %v53
  %v297 = vpop.permute.xlu0 %296
  %300 = vset.pattern.permute.xlu0 0
  %301 = vperm.xlu0 %300, %v54
  %v302 = vpop.permute.xlu0 %301
  %305 = vset.pattern.permute.xlu0 0
  %306 = vperm.xlu0 %305, %v55
  %v307 = vpop.permute.xlu0 %306
  %310 = vset.pattern.permute.xlu0 0
  %311 = vperm.xlu0 %310, %v56
  %v312 = vpop.permute.xlu0 %311
  %315 = vset.pattern.permute.xlu0 0
  %316 = vperm.xlu0 %315, %v57
  %v317 = vpop.permute.xlu0 %316
  %320 = vset.pattern.permute.xlu0 0
  %321 = vperm.xlu0 %320, %v58
  %v322 = vpop.permute.xlu0 %321
  %v324 = vmul.f32 %v247, %v182
  %v325 = vmul.f32 %v252, %v185
  %v326 = vmul.f32 %v257, %v190
  %v327 = vmul.f32 %v262, %v193
  %v328 = vmul.f32 %v267, %v198
  %v329 = vmul.f32 %v272, %v201
  %v330 = vmul.f32 %v277, %v206
  %v331 = vmul.f32 %v282, %v209
  %v332 = vmul.f32 %v287, %v214
  %v333 = vmul.f32 %v292, %v217
  %v334 = vmul.f32 %v297, %v222
  %v335 = vmul.f32 %v302, %v225
  %v336 = vmul.f32 %v307, %v230
  %v337 = vmul.f32 %v312, %v233
  %v338 = vmul.f32 %v317, %v238
  %v339 = vmul.f32 %v322, %v241
  %v340 = vpack.c.bf16 %v325, %v324
  %v341 = vpack.c.bf16 %v327, %v326
  %v342 = vpack.c.bf16 %v329, %v328
  %v343 = vpack.c.bf16 %v331, %v330
  %v344 = vpack.c.bf16 %v333, %v332
  %v345 = vpack.c.bf16 %v335, %v334
  %v346 = vpack.c.bf16 %v337, %v336
  %v347 = vpack.c.bf16 %v339, %v338
  %v364 = vunpack.c.l.b16 %v27
  %v365 = vunpack.c.l.b16 %v28
  %v366 = vunpack.c.l.b16 %v29
  %v367 = vunpack.c.l.b16 %v30
  %v368 = vunpack.c.l.b16 %v31
  %v369 = vunpack.c.l.b16 %v32
  %v370 = vunpack.c.l.b16 %v33
  %v371 = vunpack.c.l.b16 %v34
  %v372 = vunpack.c.l.b16 %v35
  %v373 = vunpack.c.l.b16 %v36
  %v374 = vunpack.c.l.b16 %v37
  %v375 = vunpack.c.l.b16 %v38
  %v376 = vunpack.c.l.b16 %v39
  %v377 = vunpack.c.l.b16 %v40
  %v378 = vunpack.c.l.b16 %v41
  %v379 = vunpack.c.l.b16 %v42
  %v380 = vpack.c.b16 %v365, %v364
  %v381 = vpack.c.b16 %v367, %v366
  %v382 = vpack.c.b16 %v369, %v368
  %v383 = vpack.c.b16 %v371, %v370
  %v384 = vpack.c.b16 %v373, %v372
  %v385 = vpack.c.b16 %v375, %v374
  %v386 = vpack.c.b16 %v377, %v376
  %v387 = vpack.c.b16 %v379, %v378
  %396 = vmatprep.subr.bf16.mxu0 0
  %397 = vmatpush1.bf16.msra.mxu0 %v340
  %398 = vmatprep.subr.bf16.mxu0 0
  %399 = vmatpush1.bf16.msra.mxu0 %v341
  %400 = vmatprep.subr.bf16.mxu0 0
  %401 = vmatpush1.bf16.msra.mxu0 %v342
  %402 = vmatprep.subr.bf16.mxu0 0
  %403 = vmatpush1.bf16.msra.mxu0 %v343
  %404 = vmatprep.subr.bf16.mxu0 0
  %405 = vmatpush1.bf16.msra.mxu0 %v344
  %406 = vmatprep.subr.bf16.mxu0 0
  %407 = vmatpush1.bf16.msra.mxu0 %v345
  %408 = vmatprep.subr.bf16.mxu0 0
  %409 = vmatpush1.bf16.msra.mxu0 %v346
  %410 = vmatprep.subr.bf16.mxu0 0
  %411 = vmatpush1.bf16.msra.mxu0 %v347
  %412 = vmatprep.subr.bf16.mxu0 0
  %413 = vmatpush1.bf16.msra.mxu0 0
  %414 = vmatprep.subr.bf16.mxu0 0
  %415 = vmatpush1.bf16.msra.mxu0 0
  %416 = vmatprep.subr.bf16.mxu0 0
  %417 = vmatpush1.bf16.msra.mxu0 0
  %418 = vmatprep.subr.bf16.mxu0 0
  %419 = vmatpush1.bf16.msra.mxu0 0
  %420 = vmatprep.subr.bf16.mxu0 0
  %421 = vmatpush1.bf16.msra.mxu0 0
  %422 = vmatprep.subr.bf16.mxu0 0
  %423 = vmatpush1.bf16.msra.mxu0 0
  %424 = vmatprep.subr.bf16.mxu0 0
  %425 = vmatpush1.bf16.msra.mxu0 0
  %426 = vmatprep.subr.bf16.mxu0 0
  %427 = vmatpush1.bf16.msra.mxu0 0
  %428 = vmatprep.mubr.bf16.mxu0 0
  %429 = vmatmul.mubr.bf16.gmra.mrb[0].mxu0 %v380
  %v430 = vpop.f32.mrb[0].mxu0
  %v431 = vadd.f32 0.0, %v430
  %v432 = vpop.f32.mrb[0].mxu0
  %v433 = vpop.f32.mrb[0].mxu0
  %v434 = vadd.f32 0.0, %v433
  %v435 = vpop.f32.mrb[0].mxu0
  %436 = vmatprep.mubr.bf16.mxu0 0
  %437 = vmatmul.mubr.bf16.gmra.mrb[0].mxu0 %v381
  %v438 = vpop.f32.mrb[0].mxu0
  %v439 = vadd.f32 0.0, %v438
  %v440 = vpop.f32.mrb[0].mxu0
  %v441 = vpop.f32.mrb[0].mxu0
  %v442 = vadd.f32 0.0, %v441
  %v443 = vpop.f32.mrb[0].mxu0
  %444 = vmatprep.mubr.bf16.mxu0 0
  %445 = vmatmul.mubr.bf16.gmra.mrb[0].mxu0 %v382
  %v446 = vpop.f32.mrb[0].mxu0
  %v447 = vadd.f32 0.0, %v446
  %v448 = vpop.f32.mrb[0].mxu0
  %v449 = vpop.f32.mrb[0].mxu0
  %v450 = vadd.f32 0.0, %v449
  %v451 = vpop.f32.mrb[0].mxu0
  %452 = vmatprep.mubr.bf16.mxu0 0
  %453 = vmatmul.mubr.bf16.gmra.mrb[0].mxu0 %v383
  %v454 = vpop.f32.mrb[0].mxu0
  %v455 = vadd.f32 0.0, %v454
  %v456 = vpop.f32.mrb[0].mxu0
  %v457 = vpop.f32.mrb[0].mxu0
  %v458 = vadd.f32 0.0, %v457
  %v459 = vpop.f32.mrb[0].mxu0
  %460 = vmatprep.mubr.bf16.mxu0 0
  %461 = vmatmul.mubr.bf16.gmra.mrb[0].mxu0 %v384
  %v462 = vpop.f32.mrb[0].mxu0
  %v463 = vadd.f32 0.0, %v462
  %v464 = vpop.f32.mrb[0].mxu0
  %v465 = vpop.f32.mrb[0].mxu0
  %v466 = vadd.f32 0.0, %v465
  %v467 = vpop.f32.mrb[0].mxu0
  %468 = vmatprep.mubr.bf16.mxu0 0
  %469 = vmatmul.mubr.bf16.gmra.mrb[0].mxu0 %v385
  %v470 = vpop.f32.mrb[0].mxu0
  %v471 = vadd.f32 0.0, %v470
  %v472 = vpop.f32.mrb[0].mxu0
  %v473 = vpop.f32.mrb[0].mxu0
  %v474 = vadd.f32 0.0, %v473
  %v475 = vpop.f32.mrb[0].mxu0
  %476 = vmatprep.mubr.bf16.mxu0 0
  %477 = vmatmul.mubr.bf16.gmra.mrb[0].mxu0 %v386
  %v478 = vpop.f32.mrb[0].mxu0
  %v479 = vadd.f32 0.0, %v478
  %v480 = vpop.f32.mrb[0].mxu0
  %v481 = vpop.f32.mrb[0].mxu0
  %v482 = vadd.f32 0.0, %v481
  %v483 = vpop.f32.mrb[0].mxu0
  %484 = vmatprep.mubr.bf16.mxu0 0
  %485 = vmatmul.mubr.bf16.gmra.mrb[0].mxu0 %v387
  %v486 = vpop.f32.mrb[0].mxu0
  %v487 = vadd.f32 0.0, %v486
  %v488 = vpop.f32.mrb[0].mxu0
  %v489 = vpop.f32.mrb[0].mxu0
  %v490 = vadd.f32 0.0, %v489
  %v491 = vpop.f32.mrb[0].mxu0
  %492 = vdwg.mxu0
  %v493 = vmul.f32 %v247, %v431
  %v494 = vmul.f32 %v252, %v434
  %v495 = vmul.f32 %v257, %v439
  %v496 = vmul.f32 %v262, %v442
  %v497 = vmul.f32 %v267, %v447
  %v498 = vmul.f32 %v272, %v450
  %v499 = vmul.f32 %v277, %v455
  %v500 = vmul.f32 %v282, %v458
  %v501 = vmul.f32 %v287, %v463
  %v502 = vmul.f32 %v292, %v466
  %v503 = vmul.f32 %v297, %v471
  %v504 = vmul.f32 %v302, %v474
  %v505 = vmul.f32 %v307, %v479
  %v506 = vmul.f32 %v312, %v482
  %v507 = vmul.f32 %v317, %v487
  %v508 = vmul.f32 %v322, %v490
  %v509 = vld [vmem:[%s4] sm:$0x1]
  %v511 = vlaneseq
  %v512 = vshrl.u32 %v511, 7
  %v513 = vsub.s32 0, %v512
  %v514 = vrot.slane %v509, %v513
  %v516 = vadd.f32 %v493, %v514
  %v517 = vadd.f32 %v494, %v514
  %v518 = vadd.f32 %v495, %v514
  %v519 = vadd.f32 %v496, %v514
  %v520 = vadd.f32 %v497, %v514
  %v521 = vadd.f32 %v498, %v514
  %v522 = vadd.f32 %v499, %v514
  %v523 = vadd.f32 %v500, %v514
  %v524 = vadd.f32 %v501, %v514
  %v525 = vadd.f32 %v502, %v514
  %v526 = vadd.f32 %v503, %v514
  %v527 = vadd.f32 %v504, %v514
  %v528 = vadd.f32 %v505, %v514
  %v529 = vadd.f32 %v506, %v514
  %v530 = vadd.f32 %v507, %v514
  %v531 = vadd.f32 %v508, %v514
  %v532 = vmax.f32 %v516, 0.0
  %v533 = vmax.f32 %v517, 0.0
  %v534 = vmax.f32 %v518, 0.0
  %v535 = vmax.f32 %v519, 0.0
  %v536 = vmax.f32 %v520, 0.0
  %v537 = vmax.f32 %v521, 0.0
  %v538 = vmax.f32 %v522, 0.0
  %v539 = vmax.f32 %v523, 0.0
  %v540 = vmax.f32 %v524, 0.0
  %v541 = vmax.f32 %v525, 0.0
  %v542 = vmax.f32 %v526, 0.0
  %v543 = vmax.f32 %v527, 0.0
  %v544 = vmax.f32 %v528, 0.0
  %v545 = vmax.f32 %v529, 0.0
  %v546 = vmax.f32 %v530, 0.0
  %v547 = vmax.f32 %v531, 0.0
  %v548 = vmul.f32 %v247, %v532
  %v549 = vmul.f32 %v252, %v533
  %v550 = vmul.f32 %v257, %v534
  %v551 = vmul.f32 %v262, %v535
  %v552 = vmul.f32 %v267, %v536
  %v553 = vmul.f32 %v272, %v537
  %v554 = vmul.f32 %v277, %v538
  %v555 = vmul.f32 %v282, %v539
  %v556 = vmul.f32 %v287, %v540
  %v557 = vmul.f32 %v292, %v541
  %v558 = vmul.f32 %v297, %v542
  %v559 = vmul.f32 %v302, %v543
  %v560 = vmul.f32 %v307, %v544
  %v561 = vmul.f32 %v312, %v545
  %v562 = vmul.f32 %v317, %v546
  %v563 = vmul.f32 %v322, %v547
  %v564 = vpack.c.bf16 %v549, %v548
  %v565 = vpack.c.bf16 %v551, %v550
  %v566 = vpack.c.bf16 %v553, %v552
  %v567 = vpack.c.bf16 %v555, %v554
  %v568 = vpack.c.bf16 %v557, %v556
  %v569 = vpack.c.bf16 %v559, %v558
  %v570 = vpack.c.bf16 %v561, %v560
  %v571 = vpack.c.bf16 %v563, %v562
  %572 = vmatprep.subr.bf16.mxu0 0
  %573 = vmatpush1.bf16.msra.mxu0 %v564
  %574 = vmatprep.subr.bf16.mxu0 0
  %575 = vmatpush1.bf16.msra.mxu0 %v565
  %576 = vmatprep.subr.bf16.mxu0 0
  %577 = vmatpush1.bf16.msra.mxu0 %v566
  %578 = vmatprep.subr.bf16.mxu0 0
  %579 = vmatpush1.bf16.msra.mxu0 %v567
  %580 = vmatprep.subr.bf16.mxu0 0
  %581 = vmatpush1.bf16.msra.mxu0 %v568
  %582 = vmatprep.subr.bf16.mxu0 0
  %583 = vmatpush1.bf16.msra.mxu0 %v569
  %584 = vmatprep.subr.bf16.mxu0 0
  %585 = vmatpush1.bf16.msra.mxu0 %v570
  %586 = vmatprep.subr.bf16.mxu0 0
  %587 = vmatpush1.bf16.msra.mxu0 %v571
  %588 = vmatprep.subr.bf16.mxu0 0
  %589 = vmatpush1.bf16.msra.mxu0 0
  %590 = vmatprep.subr.bf16.mxu0 0
  %591 = vmatpush1.bf16.msra.mxu0 0
  %592 = vmatprep.subr.bf16.mxu0 0
  %593 = vmatpush1.bf16.msra.mxu0 0
  %594 = vmatprep.subr.bf16.mxu0 0
  %595 = vmatpush1.bf16.msra.mxu0 0
  %596 = vmatprep.subr.bf16.mxu0 0
  %597 = vmatpush1.bf16.msra.mxu0 0
  %598 = vmatprep.subr.bf16.mxu0 0
  %599 = vmatpush1.bf16.msra.mxu0 0
  %600 = vmatprep.subr.bf16.mxu0 0
  %601 = vmatpush1.bf16.msra.mxu0 0
  %602 = vmatprep.subr.bf16.mxu0 0
  %603 = vmatpush1.bf16.msra.mxu0 0
  %604 = vmatprep.mubr.bf16.mxu0 0
  %605 = vmatmul.mubr.bf16.gmra.mrb[0].mxu0 %v380
  %v606 = vpop.f32.mrb[0].mxu0
  %v607 = vadd.f32 0.0, %v606
  %v608 = vpop.f32.mrb[0].mxu0
  %v609 = vpop.f32.mrb[0].mxu0
  %v610 = vadd.f32 0.0, %v609
  %v611 = vpop.f32.mrb[0].mxu0
  %612 = vmatprep.mubr.bf16.mxu0 0
  %613 = vmatmul.mubr.bf16.gmra.mrb[0].mxu0 %v381
  %v614 = vpop.f32.mrb[0].mxu0
  %v615 = vadd.f32 0.0, %v614
  %v616 = vpop.f32.mrb[0].mxu0
  %v617 = vpop.f32.mrb[0].mxu0
  %v618 = vadd.f32 0.0, %v617
  %v619 = vpop.f32.mrb[0].mxu0
  %620 = vmatprep.mubr.bf16.mxu0 0
  %621 = vmatmul.mubr.bf16.gmra.mrb[0].mxu0 %v382
  %v622 = vpop.f32.mrb[0].mxu0
  %v623 = vadd.f32 0.0, %v622
  %v624 = vpop.f32.mrb[0].mxu0
  %v625 = vpop.f32.mrb[0].mxu0
  %v626 = vadd.f32 0.0, %v625
  %v627 = vpop.f32.mrb[0].mxu0
  %628 = vmatprep.mubr.bf16.mxu0 0
  %629 = vmatmul.mubr.bf16.gmra.mrb[0].mxu0 %v383
  %v630 = vpop.f32.mrb[0].mxu0
  %v631 = vadd.f32 0.0, %v630
  %v632 = vpop.f32.mrb[0].mxu0
  %v633 = vpop.f32.mrb[0].mxu0
  %v634 = vadd.f32 0.0, %v633
  %v635 = vpop.f32.mrb[0].mxu0
  %636 = vmatprep.mubr.bf16.mxu0 0
  %637 = vmatmul.mubr.bf16.gmra.mrb[0].mxu0 %v384
  %v638 = vpop.f32.mrb[0].mxu0
  %v639 = vadd.f32 0.0, %v638
  %v640 = vpop.f32.mrb[0].mxu0
  %v641 = vpop.f32.mrb[0].mxu0
  %v642 = vadd.f32 0.0, %v641
  %v643 = vpop.f32.mrb[0].mxu0
  %644 = vmatprep.mubr.bf16.mxu0 0
  %645 = vmatmul.mubr.bf16.gmra.mrb[0].mxu0 %v385
  %v646 = vpop.f32.mrb[0].mxu0
  %v647 = vadd.f32 0.0, %v646
  %v648 = vpop.f32.mrb[0].mxu0
  %v649 = vpop.f32.mrb[0].mxu0
  %v650 = vadd.f32 0.0, %v649
  %v651 = vpop.f32.mrb[0].mxu0
  %652 = vmatprep.mubr.bf16.mxu0 0
  %653 = vmatmul.mubr.bf16.gmra.mrb[0].mxu0 %v386
  %v654 = vpop.f32.mrb[0].mxu0
  %v655 = vadd.f32 0.0, %v654
  %v656 = vpop.f32.mrb[0].mxu0
  %v657 = vpop.f32.mrb[0].mxu0
  %v658 = vadd.f32 0.0, %v657
  %v659 = vpop.f32.mrb[0].mxu0
  %660 = vmatprep.mubr.bf16.mxu0 0
  %661 = vmatmul.mubr.bf16.gmra.mrb[0].mxu0 %v387
  %v662 = vpop.f32.mrb[0].mxu0
  %v663 = vadd.f32 0.0, %v662
  %v664 = vpop.f32.mrb[0].mxu0
  %v665 = vpop.f32.mrb[0].mxu0
  %v666 = vadd.f32 0.0, %v665
  %v667 = vpop.f32.mrb[0].mxu0
  %668 = vdwg.mxu0
  %v669 = vmul.f32 %v247, %v607
  %v670 = vmul.f32 %v252, %v610
  %v671 = vmul.f32 %v257, %v615
  %v672 = vmul.f32 %v262, %v618
  %v673 = vmul.f32 %v267, %v623
  %v674 = vmul.f32 %v272, %v626
  %v675 = vmul.f32 %v277, %v631
  %v676 = vmul.f32 %v282, %v634
  %v677 = vmul.f32 %v287, %v639
  %v678 = vmul.f32 %v292, %v642
  %v679 = vmul.f32 %v297, %v647
  %v680 = vmul.f32 %v302, %v650
  %v681 = vmul.f32 %v307, %v655
  %v682 = vmul.f32 %v312, %v658
  %v683 = vmul.f32 %v317, %v663
  %v684 = vmul.f32 %v322, %v666
  %v685 = vpack.c.bf16 %v670, %v669
  %v686 = vpack.c.bf16 %v672, %v671
  %v687 = vpack.c.bf16 %v674, %v673
  %v688 = vpack.c.bf16 %v676, %v675
  %v689 = vpack.c.bf16 %v678, %v677
  %v690 = vpack.c.bf16 %v680, %v679
  %v691 = vpack.c.bf16 %v682, %v681
  %v692 = vpack.c.bf16 %v684, %v683
  %v693 = vld [vmem:[%s5] sm:$0xf]
  %v694 = vld [vmem:[%s5 + $0x4] sm:$0xf]
  %v695 = vld [vmem:[%s5 + $0x8] sm:$0xf]
  %v696 = vld [vmem:[%s5 + $0xc] sm:$0xf]
  %v697 = vld [vmem:[%s5 + $0x10] sm:$0xf]
  %v698 = vld [vmem:[%s5 + $0x14] sm:$0xf]
  %v699 = vld [vmem:[%s5 + $0x18] sm:$0xf]
  %v700 = vld [vmem:[%s5 + $0x1c] sm:$0xf]
  %v701 = vld [vmem:[%s5 + $0x20] sm:$0xf]
  %v702 = vld [vmem:[%s5 + $0x24] sm:$0xf]
  %v703 = vld [vmem:[%s5 + $0x28] sm:$0xf]
  %v704 = vld [vmem:[%s5 + $0x2c] sm:$0xf]
  %v705 = vld [vmem:[%s5 + $0x30] sm:$0xf]
  %v706 = vld [vmem:[%s5 + $0x34] sm:$0xf]
  %v707 = vld [vmem:[%s5 + $0x38] sm:$0xf]
  %v708 = vld [vmem:[%s5 + $0x3c] sm:$0xf]
  %v709 = vld [vmem:[%s6] sm:$0x1]
  %v711 = vlaneseq
  %v712 = vshrl.u32 %v711, 7
  %v713 = vsub.s32 0, %v712
  %v714 = vrot.slane %v709, %v713
  %v732 = vunpack.c.l.b16 %v693
  %v733 = vunpack.c.l.b16 %v694
  %v734 = vunpack.c.l.b16 %v695
  %v735 = vunpack.c.l.b16 %v696
  %v736 = vunpack.c.l.b16 %v697
  %v737 = vunpack.c.l.b16 %v698
  %v738 = vunpack.c.l.b16 %v699
  %v739 = vunpack.c.l.b16 %v700
  %v740 = vunpack.c.l.b16 %v701
  %v741 = vunpack.c.l.b16 %v702
  %v742 = vunpack.c.l.b16 %v703
  %v743 = vunpack.c.l.b16 %v704
  %v744 = vunpack.c.l.b16 %v705
  %v745 = vunpack.c.l.b16 %v706
  %v746 = vunpack.c.l.b16 %v707
  %v747 = vunpack.c.l.b16 %v708
  %v748 = vpack.c.b16 %v733, %v732
  %v749 = vpack.c.b16 %v735, %v734
  %v750 = vpack.c.b16 %v737, %v736
  %v751 = vpack.c.b16 %v739, %v738
  %v752 = vpack.c.b16 %v741, %v740
  %v753 = vpack.c.b16 %v743, %v742
  %v754 = vpack.c.b16 %v745, %v744
  %v755 = vpack.c.b16 %v747, %v746
  %764 = vmatprep.subr.bf16.mxu0 0
  %765 = vmatpush1.bf16.msra.mxu0 %v748
  %766 = vmatprep.subr.bf16.mxu0 0
  %767 = vmatpush1.bf16.msra.mxu0 %v749
  %768 = vmatprep.subr.bf16.mxu0 0
  %769 = vmatpush1.bf16.msra.mxu0 %v750
  %770 = vmatprep.subr.bf16.mxu0 0
  %771 = vmatpush1.bf16.msra.mxu0 %v751
  %772 = vmatprep.subr.bf16.mxu0 0
  %773 = vmatpush1.bf16.msra.mxu0 %v752
  %774 = vmatprep.subr.bf16.mxu0 0
  %775 = vmatpush1.bf16.msra.mxu0 %v753
  %776 = vmatprep.subr.bf16.mxu0 0
  %777 = vmatpush1.bf16.msra.mxu0 %v754
  %778 = vmatprep.subr.bf16.mxu0 0
  %779 = vmatpush1.bf16.msra.mxu0 %v755
  %780 = vmatprep.subr.bf16.mxu0 0
  %781 = vmatpush1.bf16.msra.mxu0 0
  %782 = vmatprep.subr.bf16.mxu0 0
  %783 = vmatpush1.bf16.msra.mxu0 0
  %784 = vmatprep.subr.bf16.mxu0 0
  %785 = vmatpush1.bf16.msra.mxu0 0
  %786 = vmatprep.subr.bf16.mxu0 0
  %787 = vmatpush1.bf16.msra.mxu0 0
  %788 = vmatprep.subr.bf16.mxu0 0
  %789 = vmatpush1.bf16.msra.mxu0 0
  %790 = vmatprep.subr.bf16.mxu0 0
  %791 = vmatpush1.bf16.msra.mxu0 0
  %792 = vmatprep.subr.bf16.mxu0 0
  %793 = vmatpush1.bf16.msra.mxu0 0
  %794 = vmatprep.subr.bf16.mxu0 0
  %795 = vmatpush1.bf16.msra.mxu0 0
  %796 = vmatprep.mubr.bf16.mxu0 0
  %797 = vmatmul.mubr.bf16.gmra.mrb[0].mxu0 %v685
  %v798 = vpop.f32.mrb[0].mxu0
  %v799 = vadd.f32 %v714, %v798
  %v800 = vpop.f32.mrb[0].mxu0
  %v801 = vpop.f32.mrb[0].mxu0
  %v802 = vadd.f32 %v714, %v801
  %v803 = vpop.f32.mrb[0].mxu0
  %804 = vmatprep.mubr.bf16.mxu0 0
  %805 = vmatmul.mubr.bf16.gmra.mrb[0].mxu0 %v686
  %v806 = vpop.f32.mrb[0].mxu0
  %v807 = vadd.f32 %v714, %v806
  %v808 = vpop.f32.mrb[0].mxu0
  %v809 = vpop.f32.mrb[0].mxu0
  %v810 = vadd.f32 %v714, %v809
  %v811 = vpop.f32.mrb[0].mxu0
  %812 = vmatprep.mubr.bf16.mxu0 0
  %813 = vmatmul.mubr.bf16.gmra.mrb[0].mxu0 %v687
  %v814 = vpop.f32.mrb[0].mxu0
  %v815 = vadd.f32 %v714, %v814
  %v816 = vpop.f32.mrb[0].mxu0
  %v817 = vpop.f32.mrb[0].mxu0
  %v818 = vadd.f32 %v714, %v817
  %v819 = vpop.f32.mrb[0].mxu0
  %820 = vmatprep.mubr.bf16.mxu0 0
  %821 = vmatmul.mubr.bf16.gmra.mrb[0].mxu0 %v688
  %v822 = vpop.f32.mrb[0].mxu0
  %v823 = vadd.f32 %v714, %v822
  %v824 = vpop.f32.mrb[0].mxu0
  %v825 = vpop.f32.mrb[0].mxu0
  %v826 = vadd.f32 %v714, %v825
  %v827 = vpop.f32.mrb[0].mxu0
  %828 = vmatprep.mubr.bf16.mxu0 0
  %829 = vmatmul.mubr.bf16.gmra.mrb[0].mxu0 %v689
  %v830 = vpop.f32.mrb[0].mxu0
  %v831 = vadd.f32 %v714, %v830
  %v832 = vpop.f32.mrb[0].mxu0
  %v833 = vpop.f32.mrb[0].mxu0
  %v834 = vadd.f32 %v714, %v833
  %v835 = vpop.f32.mrb[0].mxu0
  %836 = vmatprep.mubr.bf16.mxu0 0
  %837 = vmatmul.mubr.bf16.gmra.mrb[0].mxu0 %v690
  %v838 = vpop.f32.mrb[0].mxu0
  %v839 = vadd.f32 %v714, %v838
  %v840 = vpop.f32.mrb[0].mxu0
  %v841 = vpop.f32.mrb[0].mxu0
  %v842 = vadd.f32 %v714, %v841
  %v843 = vpop.f32.mrb[0].mxu0
  %844 = vmatprep.mubr.bf16.mxu0 0
  %845 = vmatmul.mubr.bf16.gmra.mrb[0].mxu0 %v691
  %v846 = vpop.f32.mrb[0].mxu0
  %v847 = vadd.f32 %v714, %v846
  %v848 = vpop.f32.mrb[0].mxu0
  %v849 = vpop.f32.mrb[0].mxu0
  %v850 = vadd.f32 %v714, %v849
  %v851 = vpop.f32.mrb[0].mxu0
  %852 = vmatprep.mubr.bf16.mxu0 0
  %853 = vmatmul.mubr.bf16.gmra.mrb[0].mxu0 %v692
  %v854 = vpop.f32.mrb[0].mxu0
  %v855 = vadd.f32 %v714, %v854
  %v856 = vpop.f32.mrb[0].mxu0
  %v857 = vpop.f32.mrb[0].mxu0
  %v858 = vadd.f32 %v714, %v857
  %v859 = vpop.f32.mrb[0].mxu0
  %860 = vdwg.mxu0
  %861 = vst [vmem:[%s7] sm:$0xff] %v799
  %862 = vst [vmem:[%s7 + $0x8] sm:$0xff] %v802
  %863 = vst [vmem:[%s7 + $0x10] sm:$0xff] %v807
  %864 = vst [vmem:[%s7 + $0x18] sm:$0xff] %v810
  %865 = vst [vmem:[%s7 + $0x20] sm:$0xff] %v815
  %866 = vst [vmem:[%s7 + $0x28] sm:$0xff] %v818
  %867 = vst [vmem:[%s7 + $0x30] sm:$0xff] %v823
  %868 = vst [vmem:[%s7 + $0x38] sm:$0xff] %v826
  %869 = vst [vmem:[%s7 + $0x40] sm:$0xff] %v831
  %870 = vst [vmem:[%s7 + $0x48] sm:$0xff] %v834
  %871 = vst [vmem:[%s7 + $0x50] sm:$0xff] %v839
  %872 = vst [vmem:[%s7 + $0x58] sm:$0xff] %v842
  %873 = vst [vmem:[%s7 + $0x60] sm:$0xff] %v847
  %874 = vst [vmem:[%s7 + $0x68] sm:$0xff] %v850
  %875 = vst [vmem:[%s7 + $0x70] sm:$0xff] %v855
  %876 = vst [vmem:[%s7 + $0x78] sm:$0xff] %v858
  // Predicated region
  $region30: #{gcn_model_forward.1} parent=0 // pred_check
    _
  $region31: #{gcn_model_forward.1} parent=0 // pred_check_branch
    %878 = sbr.rel (0) target = $region33
  $region32: #{gcn_model_forward.1} parent=0 // pred_region
    _
  $region33: #{gcn_model_forward.1} parent=0 // pred_fallthru
    _
  // Predicated region
  $region34: #{gcn_model_forward.1} parent=0 // pred_check
    _
  $region35: #{gcn_model_forward.1} parent=0 // pred_check_branch
    %880 = sbr.rel (0) target = $region37
  $region36: #{gcn_model_forward.1} parent=0 // pred_region
    _
  $region37: #{gcn_model_forward.1} parent=0 // pred_fallthru
    _

</llo_original>
